<compile_context>
chip_gen: v5e
topology: v5e:2x2
jax: 0.10.0
libtpu: 0.0.40
codegen_flags: <defaults>
</compile_context>

<pallas_src>
import functools

import jax
import jax.numpy as jnp
from jax.experimental import pallas as pl
from jax.experimental.pallas import tpu as pltpu

LANE = 128
SUBLANE = 8
FUSE_MAX_NODES = 1024      # n_pad <= this -> single fused pallas_call
TILE_NODE_ALIGN = 512      # tiled path: pad n to a multiple of this
TM_CAP = 1024              # row-tile cap (tiled path)
TK_CAP = 2048              # reduction-tile cap (tiled path)


def _round_up(x, m):
    return (x + m - 1) // m * m


def _pick_tile(n_pad, cap):
    """Largest multiple of 128 that divides n_pad, capped at `cap`."""
    t = min(cap, n_pad)
    while n_pad % t:
        t -= LANE
    return t


def _pad2(x, rows, cols, fill=0.0):
    return jnp.pad(x, ((0, rows - x.shape[0]), (0, cols - x.shape[1])),
                   constant_values=fill)


def _vmem_limit_bytes():
    """Generation-aware scoped-VMEM limit: half of physical, in [32, 96] MiB."""
    try:
        cap = pltpu.get_tpu_info().vmem_capacity_bytes
    except Exception:
        cap = 128 * 1024 * 1024
    return max(32 * 1024 * 1024, min(96 * 1024 * 1024, cap // 2))


def _full_spec(shape):
    zeros = (0,) * len(shape)
    return pl.BlockSpec(shape, lambda i, z=zeros: z)


# ---------------------------------------------------------------------------
# Fully fused forward for small graphs: one pallas_call, everything resident.
#   h = relu(A @ h @ W_l + b_l)  for l in 1..L;  softmax(pool @ h @ Wfc + bfc)
# ---------------------------------------------------------------------------
def _fused_forward_kernel(a_ref, h0_ref, w1_ref, b1_ref, wl_ref, bl_ref,
                          pool_ref, wfc_ref, bfc_ref, o_ref, *, num_extra):
    a = a_ref[...]                                        # (N, N) bf16 resident
    # layer 1 (input_features -> model_dim)
    agg = jnp.dot(a, h0_ref[...], preferred_element_type=jnp.float32)
    h = jnp.maximum(
        jnp.dot(agg, w1_ref[...], preferred_element_type=jnp.float32)
        + b1_ref[...], 0.0)
    # layers 2..L (model_dim -> model_dim), statically unrolled
    for l in range(num_extra):
        agg = jnp.dot(a, h.astype(jnp.bfloat16),
                      preferred_element_type=jnp.float32)
        h = jnp.maximum(
            jnp.dot(agg, wl_ref[l], preferred_element_type=jnp.float32)
            + bl_ref[l], 0.0)
    # global mean pool + fc1 + softmax (padded classes have -1e30 bias)
    pooled = jnp.dot(pool_ref[...], h.astype(jnp.bfloat16),
                     preferred_element_type=jnp.float32)
    logits = jnp.dot(pooled, wfc_ref[...],
                     preferred_element_type=jnp.float32) + bfc_ref[...]
    m = jnp.max(logits, axis=1, keepdims=True)
    e = jnp.exp(logits - m)
    denom = jnp.sum(e, axis=1, keepdims=True)
    o_ref[...] = e * pl.reciprocal(denom, approx=True)


def _fused_forward(a_p, h0, w1_p, b1_p, wl_p, bl_p, pool_p, wfc_p, bfc_p,
                   *, num_extra, vmem_limit):
    n_pad = a_p.shape[0]
    f_pad = h0.shape[1]
    d_pad = w1_p.shape[1]
    b_pad = pool_p.shape[0]
    c_pad = wfc_p.shape[1]
    ne = wl_p.shape[0]

    flops = (2 * n_pad * n_pad * f_pad + 2 * n_pad * f_pad * d_pad
             + num_extra * (2 * n_pad * n_pad * d_pad
                            + 2 * n_pad * d_pad * d_pad)
             + 2 * b_pad * n_pad * d_pad + 2 * b_pad * d_pad * c_pad)
    bytes_accessed = (a_p.size * 2 + h0.size * 2 + w1_p.size * 2
                      + wl_p.size * 2 + pool_p.size * 2 + wfc_p.size * 2
                      + (b1_p.size + bl_p.size + bfc_p.size) * 4
                      + b_pad * c_pad * 4)

    return pl.pallas_call(
        functools.partial(_fused_forward_kernel, num_extra=num_extra),
        out_shape=jax.ShapeDtypeStruct((b_pad, c_pad), jnp.float32),
        grid_spec=pltpu.PrefetchScalarGridSpec(
            num_scalar_prefetch=0,
            grid=(1,),
            in_specs=[
                _full_spec((n_pad, n_pad)),          # A
                _full_spec((n_pad, f_pad)),          # h0
                _full_spec((f_pad, d_pad)),          # W1
                _full_spec((1, d_pad)),              # b1
                _full_spec((ne, d_pad, d_pad)),      # W_l stacked
                _full_spec((ne, 1, d_pad)),          # b_l stacked
                _full_spec((b_pad, n_pad)),          # pool
                _full_spec((d_pad, c_pad)),          # Wfc
                _full_spec((1, c_pad)),              # bfc
            ],
            out_specs=_full_spec((b_pad, c_pad)),
        ),
        compiler_params=pltpu.CompilerParams(
            dimension_semantics=("arbitrary",),
            vmem_limit_bytes=vmem_limit,
        ),
        cost_estimate=pl.CostEstimate(
            flops=flops, transcendentals=b_pad * c_pad,
            bytes_accessed=bytes_accessed),
    )(a_p, h0, w1_p, b1_p, wl_p, bl_p, pool_p, wfc_p, bfc_p)


# ---------------------------------------------------------------------------
# Tiled message-passing layer (non-last): h_out = relu((A @ h) @ W + b)
# grid = (row_tiles, k_tiles); K is the reduction over node columns of A.
# ---------------------------------------------------------------------------
def _mp_layer_kernel(a_ref, h_ref, w_ref, b_ref, o_ref, acc_ref):
    k = pl.program_id(1)

    @pl.when(k == 0)
    def _():
        acc_ref[...] = jnp.zeros_like(acc_ref)

    # aggregate: acc += A_tile @ h_tile   (bf16 operands, f32 accumulation)
    acc_ref[...] += jnp.dot(a_ref[...], h_ref[...],
                            preferred_element_type=jnp.float32)

    @pl.when(k == pl.num_programs(1) - 1)
    def _():
        # keep the f32 accumulator as the LHS of agg @ W (accuracy)
        h_new = jnp.dot(acc_ref[...], w_ref[...],
                        preferred_element_type=jnp.float32)
        h_new = jnp.maximum(h_new + b_ref[...], 0.0)
        o_ref[...] = h_new.astype(o_ref.dtype)


def _mp_layer(a, h, w, b, *, tm, tk, vmem_limit):
    n_pad = a.shape[0]
    d_in = h.shape[1]
    d_out = w.shape[1]
    row_tiles = n_pad // tm
    grid = (row_tiles, n_pad // tk)

    flops = 2 * n_pad * n_pad * d_in + 2 * n_pad * d_in * d_out
    bytes_accessed = (a.size * 2 + h.size * 2 * row_tiles + w.size * 2
                      + b.size * 4 + n_pad * d_out * 2)

    return pl.pallas_call(
        _mp_layer_kernel,
        out_shape=jax.ShapeDtypeStruct((n_pad, d_out), jnp.bfloat16),
        grid_spec=pltpu.PrefetchScalarGridSpec(
            num_scalar_prefetch=0,
            grid=grid,
            in_specs=[
                pl.BlockSpec((tm, tk), lambda i, k: (i, k)),       # A tile
                pl.BlockSpec((tk, d_in), lambda i, k: (k, 0)),     # h tile
                pl.BlockSpec((d_in, d_out), lambda i, k: (0, 0)),  # W resident
                pl.BlockSpec((1, d_out), lambda i, k: (0, 0)),     # b resident
            ],
            out_specs=pl.BlockSpec((tm, d_out), lambda i, k: (i, 0)),
            scratch_shapes=[pltpu.VMEM((tm, d_in), jnp.float32)],
        ),
        compiler_params=pltpu.CompilerParams(
            dimension_semantics=("parallel", "arbitrary"),
            vmem_limit_bytes=vmem_limit,
        ),
        cost_estimate=pl.CostEstimate(
            flops=flops, transcendentals=0, bytes_accessed=bytes_accessed),
    )(a, h, w, b)


# ---------------------------------------------------------------------------
# Tiled LAST message-passing layer fused with mean-pool + fc1 + softmax.
# Pooled sums accumulate in a (B, D) f32 VMEM scratch as each row tile's
# h_new is produced; the fc+softmax epilogue runs on the final grid step.
# h of the last layer is never written back to HBM.
# ---------------------------------------------------------------------------
def _mp_last_pool_fc_softmax_kernel(a_ref, h_ref, w_ref, b_ref, pool_ref,
                                    wfc_ref, bfc_ref, o_ref,
                                    acc_ref, pooled_ref):
    i = pl.program_id(0)
    k = pl.program_id(1)
    k_last = pl.num_programs(1) - 1

    @pl.when((i == 0) & (k == 0))
    def _():
        pooled_ref[...] = jnp.zeros_like(pooled_ref)

    @pl.when(k == 0)
    def _():
        acc_ref[...] = jnp.zeros_like(acc_ref)

    acc_ref[...] += jnp.dot(a_ref[...], h_ref[...],
                            preferred_element_type=jnp.float32)

    @pl.when(k == k_last)
    def _():
        h_new = jnp.maximum(
            jnp.dot(acc_ref[...], w_ref[...],
                    preferred_element_type=jnp.float32) + b_ref[...], 0.0)
        pooled_ref[...] += jnp.dot(pool_ref[...], h_new.astype(jnp.bfloat16),
                                   preferred_element_type=jnp.float32)

    @pl.when((i == pl.num_programs(0) - 1) & (k == k_last))
    def _():
        logits = jnp.dot(pooled_ref[...], wfc_ref[...],
                         preferred_element_type=jnp.float32) + bfc_ref[...]
        m = jnp.max(logits, axis=1, keepdims=True)
        e = jnp.exp(logits - m)
        denom = jnp.sum(e, axis=1, keepdims=True)
        o_ref[...] = e * pl.reciprocal(denom, approx=True)


def _mp_last_pool_fc_softmax(a, h, w, b, pool, wfc, bfc, *, tm, tk,
                             vmem_limit):
    n_pad = a.shape[0]
    d_in = h.shape[1]
    d_out = w.shape[1]
    b_pad = pool.shape[0]
    c_pad = wfc.shape[1]
    row_tiles = n_pad // tm
    grid = (row_tiles, n_pad // tk)

    flops = (2 * n_pad * n_pad * d_in + 2 * n_pad * d_in * d_out
             + 2 * b_pad * n_pad * d_out + 2 * b_pad * d_out * c_pad)
    bytes_accessed = (a.size * 2 + h.size * 2 * row_tiles + w.size * 2
                      + b.size * 4 + pool.size * 2 + wfc.size * 2
                      + bfc.size * 4 + b_pad * c_pad * 4)

    return pl.pallas_call(
        _mp_last_pool_fc_softmax_kernel,
        out_shape=jax.ShapeDtypeStruct((b_pad, c_pad), jnp.float32),
        grid_spec=pltpu.PrefetchScalarGridSpec(
            num_scalar_prefetch=0,
            grid=grid,
            in_specs=[
                pl.BlockSpec((tm, tk), lambda i, k: (i, k)),        # A tile
                pl.BlockSpec((tk, d_in), lambda i, k: (k, 0)),      # h tile
                pl.BlockSpec((d_in, d_out), lambda i, k: (0, 0)),   # W
                pl.BlockSpec((1, d_out), lambda i, k: (0, 0)),      # b
                pl.BlockSpec((b_pad, tm), lambda i, k: (0, i)),     # pool cols
                pl.BlockSpec((d_out, c_pad), lambda i, k: (0, 0)),  # Wfc
                pl.BlockSpec((1, c_pad), lambda i, k: (0, 0)),      # bfc
            ],
            out_specs=pl.BlockSpec((b_pad, c_pad), lambda i, k: (0, 0)),
            scratch_shapes=[pltpu.VMEM((tm, d_in), jnp.float32),
                            pltpu.VMEM((b_pad, d_out), jnp.float32)],
        ),
        compiler_params=pltpu.CompilerParams(
            # pooled accumulator + output carry across BOTH axes
            dimension_semantics=("arbitrary", "arbitrary"),
            vmem_limit_bytes=vmem_limit,
        ),
        cost_estimate=pl.CostEstimate(
            flops=flops, transcendentals=b_pad * c_pad,
            bytes_accessed=bytes_accessed),
    )(a, h, w, b, pool, wfc, bfc)


# ---------------------------------------------------------------------------
# Parameter preparation (done ONCE, outside the jitted forward): pad to
# lane-dense shapes and cast MXU operands to bf16. Padded class columns get a
# -1e30 bias so softmax ignores them.
# ---------------------------------------------------------------------------
def prepare_params(w1, b1, wl, bl, wfc, bfc):
    f_pad = _round_up(w1.shape[0], LANE)
    d_pad = _round_up(w1.shape[1], LANE)
    c_pad = _round_up(wfc.shape[1], LANE)
    num_extra = wl.shape[0]

    w1_p = _pad2(w1, f_pad, d_pad).astype(jnp.bfloat16)
    b1_p = _pad2(b1.astype(jnp.float32), 1, d_pad)
    if num_extra > 0:
        wl_p = jnp.pad(wl, ((0, 0), (0, d_pad - wl.shape[1]),
                            (0, d_pad - wl.shape[2]))).astype(jnp.bfloat16)
        bl_p = jnp.pad(bl.astype(jnp.float32),
                       ((0, 0), (0, 0), (0, d_pad - bl.shape[2])))
    else:
        wl_p = jnp.zeros((1, d_pad, d_pad), jnp.bfloat16)   # unused dummy
        bl_p = jnp.zeros((1, 1, d_pad), jnp.float32)
    wfc_p = _pad2(wfc, d_pad, c_pad).astype(jnp.bfloat16)
    bfc_p = jnp.pad(bfc.astype(jnp.float32),
                    ((0, 0), (0, c_pad - bfc.shape[1])),
                    constant_values=-1e30)
    return w1_p, b1_p, wl_p, bl_p, wfc_p, bfc_p


# ---------------------------------------------------------------------------
# Full forward. Small graphs -> single fused call; large graphs -> tiled MP
# layers + pool/fc/softmax fused into the last layer.
# ---------------------------------------------------------------------------
def duvenaud_forward(a_hat, x, pool, w1_p, b1_p, wl_p, bl_p, wfc_p, bfc_p,
                     *, num_extra, out_dim):
    n = a_hat.shape[0]
    b_graphs = pool.shape[0]
    f_pad = w1_p.shape[0]
    b_pad = _round_up(max(b_graphs, 1), SUBLANE)
    vmem_limit = _vmem_limit_bytes()

    n_pad128 = _round_up(n, LANE)
    use_fused = n_pad128 <= FUSE_MAX_NODES
    # Tiled path: pad n to a multiple of the target tile so _pick_tile never
    # silently degrades to a 128-wide tile (padding bytes < per-step overhead).
    n_pad = n_pad128 if use_fused else _round_up(n, TILE_NODE_ALIGN)

    # Padded COLUMNS of A and pool are zero, so padded node rows (which become
    # relu(b) != 0 after each layer) never leak into real rows or the pool.
    a_p = _pad2(a_hat, n_pad, n_pad).astype(jnp.bfloat16)
    h0 = _pad2(x, n_pad, f_pad).astype(jnp.bfloat16)
    pool_p = _pad2(pool, b_pad, n_pad).astype(jnp.bfloat16)

    if use_fused:
        out = _fused_forward(a_p, h0, w1_p, b1_p, wl_p, bl_p, pool_p, wfc_p,
                             bfc_p, num_extra=num_extra,
                             vmem_limit=vmem_limit)
    else:
        tm = _pick_tile(n_pad, TM_CAP)
        tk = _pick_tile(n_pad, TK_CAP)
        layers = [(w1_p, b1_p)] + [(wl_p[l], bl_p[l])
                                   for l in range(num_extra)]
        h = h0
        for (w, b) in layers[:-1]:
            h = _mp_layer(a_p, h, w, b, tm=tm, tk=tk, vmem_limit=vmem_limit)
        w_last, b_last = layers[-1]
        out = _mp_last_pool_fc_softmax(a_p, h, w_last, b_last, pool_p, wfc_p,
                                       bfc_p, tm=tm, tk=tk,
                                       vmem_limit=vmem_limit)
    return out[:b_graphs, :out_dim]


def build_dense_graph_ops(edge_index, batch, num_nodes, num_graphs):
    """Glue: (edge_index, batch) -> dense matmul operands (built once)."""
    src, dst = edge_index[0], edge_index[1]
    a = jnp.zeros((num_nodes, num_nodes), jnp.float32)
    a = a.at[dst, src].add(1.0)                       # sum-aggregate neighbors
    a = a + jnp.eye(num_nodes, dtype=jnp.float32)     # + self loop
    one_hot = (batch[None, :] == jnp.arange(num_graphs)[:, None]).astype(
        jnp.float32)
    counts = jnp.maximum(one_hot.sum(axis=1, keepdims=True), 1.0)
    pool = one_hot / counts                           # global mean pool matrix
    return a, pool


def reference_forward(a, x, w1, b1, wl, bl, pool, wfc, bfc):
    h = jnp.maximum(a @ x @ w1 + b1, 0.0)
    for l in range(wl.shape[0]):
        h = jnp.maximum(a @ h @ wl[l] + bl[l], 0.0)
    logits = (pool @ h) @ wfc + bfc
    return jax.nn.softmax(logits, axis=1)


if __name__ == "__main__":
    # ----- module hyperparameters -----
    out_dim = 8
    input_features = 16
    layers_num = 3
    model_dim = 32

    key = jax.random.PRNGKey(0)
    kx1, kx2, kw1, kb1, kwl, kbl, kwf, kbf = jax.random.split(key, 8)

    # ----- deterministic parameters (padded/cast once, outside the forward) --
    w1 = jax.random.normal(kw1, (input_features, model_dim), jnp.float32) * 0.1
    b1 = jax.random.normal(kb1, (1, model_dim), jnp.float32) * 0.1
    wl = jax.random.normal(kwl, (layers_num - 1, model_dim, model_dim),
                           jnp.float32) * 0.1
    bl = jax.random.normal(kbl, (layers_num - 1, 1, model_dim),
                           jnp.float32) * 0.1
    wfc = jax.random.normal(kwf, (model_dim, out_dim), jnp.float32) * 0.1
    bfc = jax.random.normal(kbf, (1, out_dim), jnp.float32) * 0.1
    params = prepare_params(w1, b1, wl, bl, wfc, bfc)

    fwd = jax.jit(functools.partial(duvenaud_forward,
                                    num_extra=layers_num - 1,
                                    out_dim=out_dim))

    def make_batch(k, num_nodes, nodes_per_graph, feat):
        """Synthetic (data.x, edge_index, batch): a ring inside each graph."""
        num_graphs = num_nodes // nodes_per_graph
        x = jax.random.normal(k, (num_nodes, feat), jnp.float32)
        nodes = jnp.arange(num_nodes)
        g = nodes // nodes_per_graph
        nxt = (nodes % nodes_per_graph + 1) % nodes_per_graph \
            + g * nodes_per_graph
        edge_index = jnp.stack([jnp.concatenate([nodes, nxt]),
                                jnp.concatenate([nxt, nodes])])
        a, pool = build_dense_graph_ops(edge_index, g, num_nodes, num_graphs)
        return x, a, pool, num_graphs

    # --- small batch (the module-scale case): single fused pallas_call path --
    x1, a1, pool1, g1 = make_batch(kx1, 32, 8, input_features)
    out1 = jax.block_until_ready(fwd(a1, x1, pool1, *params))
    ref1 = reference_forward(a1, x1, w1, b1, wl, bl, pool1, wfc, bfc)
    assert out1.shape == (g1, out_dim)
    assert bool(jnp.all(jnp.isfinite(out1)))
    # pl.reciprocal(approx=True): rows sum to 1 only approximately (~1e-3).
    assert bool(jnp.allclose(jnp.sum(out1, axis=1), 1.0, atol=1e-2))
    assert bool(jnp.allclose(out1, ref1, atol=3e-2)), (out1, ref1)

    # --- larger batch: exercises the tiled multi-step-grid path --------------
    x2, a2, pool2, g2 = make_batch(kx2, 2500, 250, input_features)
    out2 = jax.block_until_ready(fwd(a2, x2, pool2, *params))
    ref2 = reference_forward(a2, x2, w1, b1, wl, bl, pool2, wfc, bfc)
    assert out2.shape == (g2, out_dim)
    assert bool(jnp.all(jnp.isfinite(out2)))
    assert bool(jnp.allclose(jnp.sum(out2, axis=1), 1.0, atol=1e-2))
    assert bool(jnp.allclose(out2, ref2, atol=5e-2)), \
        float(jnp.max(jnp.abs(out2 - ref2)))

    print("KERNEL_OK")
</pallas_src>

<mosaic_0001>
module attributes {stable_mosaic.version = 11 : i64} {
  func.func @_fused_forward_kernel(%arg0: i32, %arg1: memref<128x128xbf16, #tpu.memory_space<vmem>>, %arg2: memref<128x128xbf16, #tpu.memory_space<vmem>>, %arg3: memref<128x128xbf16, #tpu.memory_space<vmem>>, %arg4: memref<1x128xf32, #tpu.memory_space<vmem>>, %arg5: memref<2x128x128xbf16, #tpu.memory_space<vmem>>, %arg6: memref<2x1x128xf32, #tpu.memory_space<vmem>>, %arg7: memref<8x128xbf16, #tpu.memory_space<vmem>>, %arg8: memref<128x128xbf16, #tpu.memory_space<vmem>>, %arg9: memref<1x128xf32, #tpu.memory_space<vmem>>, %arg10: memref<8x128xf32, #tpu.memory_space<vmem>>) attributes {dimension_semantics = [#tpu.dimension_semantics<arbitrary>], iteration_bounds = array<i64: 1>, scalar_prefetch = 0 : i64, scratch_operands = 0 : i64, tpu.core_type = #tpu.core_type<tc>, window_params = [{pipeline_mode = #tpu.pipeline_mode<synchronous>, transform_indices = @transform_0, window_bounds = array<i64: 128, 128>}, {pipeline_mode = #tpu.pipeline_mode<synchronous>, transform_indices = @transform_1, window_bounds = array<i64: 128, 128>}, {pipeline_mode = #tpu.pipeline_mode<synchronous>, transform_indices = @transform_2, window_bounds = array<i64: 128, 128>}, {pipeline_mode = #tpu.pipeline_mode<synchronous>, transform_indices = @transform_3, window_bounds = array<i64: 1, 128>}, {pipeline_mode = #tpu.pipeline_mode<synchronous>, transform_indices = @transform_4, window_bounds = array<i64: 2, 128, 128>}, {pipeline_mode = #tpu.pipeline_mode<synchronous>, transform_indices = @transform_5, window_bounds = array<i64: 2, 1, 128>}, {pipeline_mode = #tpu.pipeline_mode<synchronous>, transform_indices = @transform_6, window_bounds = array<i64: 8, 128>}, {pipeline_mode = #tpu.pipeline_mode<synchronous>, transform_indices = @transform_7, window_bounds = array<i64: 128, 128>}, {pipeline_mode = #tpu.pipeline_mode<synchronous>, transform_indices = @transform_8, window_bounds = array<i64: 1, 128>}, {pipeline_mode = #tpu.pipeline_mode<synchronous>, transform_indices = @transform_9, window_bounds = array<i64: 8, 128>}]} {
    %c0 = arith.constant 0 : index
    %c0_0 = arith.constant 0 : index
    %0 = vector.load %arg1[%c0, %c0_0] : memref<128x128xbf16, #tpu.memory_space<vmem>>, vector<128x128xbf16>
    %c0_1 = arith.constant 0 : index
    %c0_2 = arith.constant 0 : index
    %1 = vector.load %arg2[%c0_1, %c0_2] : memref<128x128xbf16, #tpu.memory_space<vmem>>, vector<128x128xbf16>
    %cst = arith.constant dense<0.000000e+00> : vector<128x128xf32>
    %2 = tpu.matmul %0, %1, %cst {dimension_numbers = #tpu.dot_dimension_numbers<[1], [0], [0], [1], [0, 0, 1, 1], [], []>} : vector<128x128xbf16>, vector<128x128xbf16>, vector<128x128xf32> -> vector<128x128xf32>
    %c0_3 = arith.constant 0 : index
    %c0_4 = arith.constant 0 : index
    %3 = vector.load %arg3[%c0_3, %c0_4] : memref<128x128xbf16, #tpu.memory_space<vmem>>, vector<128x128xbf16>
    %cst_5 = arith.constant dense<0.000000e+00> : vector<128x128xf32>
    %4 = tpu.matmul %2, %3, %cst_5 {dimension_numbers = #tpu.dot_dimension_numbers<[1], [0], [0], [1], [0, 0, 1, 1], [], []>} : vector<128x128xf32>, vector<128x128xbf16>, vector<128x128xf32> -> vector<128x128xf32>
    %c0_6 = arith.constant 0 : index
    %c0_7 = arith.constant 0 : index
    %5 = vector.load %arg4[%c0_6, %c0_7] : memref<1x128xf32, #tpu.memory_space<vmem>>, vector<1x128xf32>
    %6 = vector.broadcast %5 : vector<1x128xf32> to vector<128x128xf32>
    %7 = arith.addf %4, %6 : vector<128x128xf32>
    %cst_8 = arith.constant 0.000000e+00 : f32
    %8 = vector.broadcast %cst_8 : f32 to vector<128x128xf32>
    %9 = arith.maximumf %7, %8 : vector<128x128xf32>
    %10 = arith.truncf %9 : vector<128x128xf32> to vector<128x128xbf16>
    %cst_9 = arith.constant dense<0.000000e+00> : vector<128x128xf32>
    %11 = tpu.matmul %0, %10, %cst_9 {dimension_numbers = #tpu.dot_dimension_numbers<[1], [0], [0], [1], [0, 0, 1, 1], [], []>} : vector<128x128xbf16>, vector<128x128xbf16>, vector<128x128xf32> -> vector<128x128xf32>
    %c0_10 = arith.constant 0 : index
    %c0_11 = arith.constant 0 : index
    %c0_12 = arith.constant 0 : index
    %12 = vector.load %arg5[%c0_10, %c0_11, %c0_12] : memref<2x128x128xbf16, #tpu.memory_space<vmem>>, vector<1x128x128xbf16>
    %13 = vector.shape_cast %12 : vector<1x128x128xbf16> to vector<128x128xbf16>
    %cst_13 = arith.constant dense<0.000000e+00> : vector<128x128xf32>
    %14 = tpu.matmul %11, %13, %cst_13 {dimension_numbers = #tpu.dot_dimension_numbers<[1], [0], [0], [1], [0, 0, 1, 1], [], []>} : vector<128x128xf32>, vector<128x128xbf16>, vector<128x128xf32> -> vector<128x128xf32>
    %c0_14 = arith.constant 0 : index
    %c0_15 = arith.constant 0 : index
    %c0_16 = arith.constant 0 : index
    %15 = vector.load %arg6[%c0_14, %c0_15, %c0_16] : memref<2x1x128xf32, #tpu.memory_space<vmem>>, vector<1x1x128xf32>
    %16 = vector.shape_cast %15 : vector<1x1x128xf32> to vector<1x128xf32>
    %17 = vector.broadcast %16 : vector<1x128xf32> to vector<128x128xf32>
    %18 = arith.addf %14, %17 : vector<128x128xf32>
    %cst_17 = arith.constant 0.000000e+00 : f32
    %19 = vector.broadcast %cst_17 : f32 to vector<128x128xf32>
    %20 = arith.maximumf %18, %19 : vector<128x128xf32>
    %21 = arith.truncf %20 : vector<128x128xf32> to vector<128x128xbf16>
    %cst_18 = arith.constant dense<0.000000e+00> : vector<128x128xf32>
    %22 = tpu.matmul %0, %21, %cst_18 {dimension_numbers = #tpu.dot_dimension_numbers<[1], [0], [0], [1], [0, 0, 1, 1], [], []>} : vector<128x128xbf16>, vector<128x128xbf16>, vector<128x128xf32> -> vector<128x128xf32>
    %c1 = arith.constant 1 : index
    %c0_19 = arith.constant 0 : index
    %c0_20 = arith.constant 0 : index
    %23 = vector.load %arg5[%c1, %c0_19, %c0_20] : memref<2x128x128xbf16, #tpu.memory_space<vmem>>, vector<1x128x128xbf16>
    %24 = vector.shape_cast %23 : vector<1x128x128xbf16> to vector<128x128xbf16>
    %cst_21 = arith.constant dense<0.000000e+00> : vector<128x128xf32>
    %25 = tpu.matmul %22, %24, %cst_21 {dimension_numbers = #tpu.dot_dimension_numbers<[1], [0], [0], [1], [0, 0, 1, 1], [], []>} : vector<128x128xf32>, vector<128x128xbf16>, vector<128x128xf32> -> vector<128x128xf32>
    %c1_22 = arith.constant 1 : index
    %c0_23 = arith.constant 0 : index
    %c0_24 = arith.constant 0 : index
    %26 = vector.load %arg6[%c1_22, %c0_23, %c0_24] : memref<2x1x128xf32, #tpu.memory_space<vmem>>, vector<1x1x128xf32>
    %27 = vector.shape_cast %26 : vector<1x1x128xf32> to vector<1x128xf32>
    %28 = vector.broadcast %27 : vector<1x128xf32> to vector<128x128xf32>
    %29 = arith.addf %25, %28 : vector<128x128xf32>
    %cst_25 = arith.constant 0.000000e+00 : f32
    %30 = vector.broadcast %cst_25 : f32 to vector<128x128xf32>
    %31 = arith.maximumf %29, %30 : vector<128x128xf32>
    %c0_26 = arith.constant 0 : index
    %c0_27 = arith.constant 0 : index
    %32 = vector.load %arg7[%c0_26, %c0_27] : memref<8x128xbf16, #tpu.memory_space<vmem>>, vector<8x128xbf16>
    %33 = arith.truncf %31 : vector<128x128xf32> to vector<128x128xbf16>
    %cst_28 = arith.constant dense<0.000000e+00> : vector<8x128xf32>
    %34 = tpu.matmul %32, %33, %cst_28 {dimension_numbers = #tpu.dot_dimension_numbers<[1], [0], [0], [1], [0, 0, 1, 1], [], []>} : vector<8x128xbf16>, vector<128x128xbf16>, vector<8x128xf32> -> vector<8x128xf32>
    %c0_29 = arith.constant 0 : index
    %c0_30 = arith.constant 0 : index
    %35 = vector.load %arg8[%c0_29, %c0_30] : memref<128x128xbf16, #tpu.memory_space<vmem>>, vector<128x128xbf16>
    %cst_31 = arith.constant dense<0.000000e+00> : vector<8x128xf32>
    %36 = tpu.matmul %34, %35, %cst_31 {dimension_numbers = #tpu.dot_dimension_numbers<[1], [0], [0], [1], [0, 0, 1, 1], [], []>} : vector<8x128xf32>, vector<128x128xbf16>, vector<8x128xf32> -> vector<8x128xf32>
    %c0_32 = arith.constant 0 : index
    %c0_33 = arith.constant 0 : index
    %37 = vector.load %arg9[%c0_32, %c0_33] : memref<1x128xf32, #tpu.memory_space<vmem>>, vector<1x128xf32>
    %38 = vector.broadcast %37 : vector<1x128xf32> to vector<8x128xf32>
    %39 = arith.addf %36, %38 : vector<8x128xf32>
    %cst_34 = arith.constant dense<0xFF800000> : vector<8xf32>
    %40 = vector.multi_reduction <maximumf>, %39, %cst_34 [1] : vector<8x128xf32> to vector<8xf32>
    %41 = vector.shape_cast %40 : vector<8xf32> to vector<8x1xf32>
    %42 = vector.broadcast %41 : vector<8x1xf32> to vector<8x128xf32>
    %43 = arith.subf %39, %42 : vector<8x128xf32>
    %44 = math.exp %43 : vector<8x128xf32>
    %cst_35 = arith.constant dense<0.000000e+00> : vector<8xf32>
    %45 = vector.multi_reduction <add>, %44, %cst_35 [1] : vector<8x128xf32> to vector<8xf32>
    %46 = vector.shape_cast %45 : vector<8xf32> to vector<8x1xf32>
    %47 = tpu.reciprocal %46 {approx = true} : vector<8x1xf32> -> vector<8x1xf32>
    %48 = vector.broadcast %47 : vector<8x1xf32> to vector<8x128xf32>
    %49 = arith.mulf %44, %48 : vector<8x128xf32>
    %c0_36 = arith.constant 0 : index
    %c0_37 = arith.constant 0 : index
    %50 = vector.load %arg10[%c0_36, %c0_37] : memref<8x128xf32, #tpu.memory_space<vmem>>, vector<8x128xf32>
    tpu.vector_store %arg10[%c0_36, %c0_37], %49 {strides = array<i32>} : memref<8x128xf32, #tpu.memory_space<vmem>>, vector<8x128xf32>,
    return
  }
  func.func @transform_0(%arg0: i32) -> (i32, i32) {
    %c0_i32 = arith.constant 0 : i32
    %c0_i32_0 = arith.constant 0 : i32
    %c0_i32_1 = arith.constant 0 : i32
    return %c0_i32, %c0_i32_0 : i32, i32
  }
  func.func @transform_1(%arg0: i32) -> (i32, i32) {
    %c0_i32 = arith.constant 0 : i32
    %c0_i32_0 = arith.constant 0 : i32
    %c0_i32_1 = arith.constant 0 : i32
    return %c0_i32, %c0_i32_0 : i32, i32
  }
  func.func @transform_2(%arg0: i32) -> (i32, i32) {
    %c0_i32 = arith.constant 0 : i32
    %c0_i32_0 = arith.constant 0 : i32
    %c0_i32_1 = arith.constant 0 : i32
    return %c0_i32, %c0_i32_0 : i32, i32
  }
  func.func @transform_3(%arg0: i32) -> (i32, i32) {
    %c0_i32 = arith.constant 0 : i32
    %c0_i32_0 = arith.constant 0 : i32
    %c0_i32_1 = arith.constant 0 : i32
    return %c0_i32, %c0_i32_0 : i32, i32
  }
  func.func @transform_4(%arg0: i32) -> (i32, i32, i32) {
    %c0_i32 = arith.constant 0 : i32
    %c0_i32_0 = arith.constant 0 : i32
    %c0_i32_1 = arith.constant 0 : i32
    %c0_i32_2 = arith.constant 0 : i32
    return %c0_i32, %c0_i32_0, %c0_i32_1 : i32, i32, i32
  }
  func.func @transform_5(%arg0: i32) -> (i32, i32, i32) {
    %c0_i32 = arith.constant 0 : i32
    %c0_i32_0 = arith.constant 0 : i32
    %c0_i32_1 = arith.constant 0 : i32
    %c0_i32_2 = arith.constant 0 : i32
    return %c0_i32, %c0_i32_0, %c0_i32_1 : i32, i32, i32
  }
  func.func @transform_6(%arg0: i32) -> (i32, i32) {
    %c0_i32 = arith.constant 0 : i32
    %c0_i32_0 = arith.constant 0 : i32
    %c0_i32_1 = arith.constant 0 : i32
    return %c0_i32, %c0_i32_0 : i32, i32
  }
  func.func @transform_7(%arg0: i32) -> (i32, i32) {
    %c0_i32 = arith.constant 0 : i32
    %c0_i32_0 = arith.constant 0 : i32
    %c0_i32_1 = arith.constant 0 : i32
    return %c0_i32, %c0_i32_0 : i32, i32
  }
  func.func @transform_8(%arg0: i32) -> (i32, i32) {
    %c0_i32 = arith.constant 0 : i32
    %c0_i32_0 = arith.constant 0 : i32
    %c0_i32_1 = arith.constant 0 : i32
    return %c0_i32, %c0_i32_0 : i32, i32
  }
  func.func @transform_9(%arg0: i32) -> (i32, i32) {
    %c0_i32 = arith.constant 0 : i32
    %c0_i32_0 = arith.constant 0 : i32
    %c0_i32_1 = arith.constant 0 : i32
    return %c0_i32, %c0_i32_0 : i32, i32
  }
}

</mosaic_0001>

<llo_original>
// kernel: duvenaud_forward.1
$region0: #{duvenaud_forward.1}
  #allocation0 [shape = 'u32[]', space=smem, size = 0x4, offset = 0x4, fixed_abs, tag = 'smem constant byte address 0x4 - core index']
  #allocation1 [shape = 'u32[72,128]{1,0:T(1,128)}', space=vmem, size = 0x9000, scoped, tag = 'internal scratch']
  %s0 = inlined_call_operand.vmem [shape: bf16[128,128], index: 0, kind: input, shape index: {}]
  %s1 = inlined_call_operand.vmem [shape: bf16[128,128], index: 1, kind: input, shape index: {}]
  %s2 = inlined_call_operand.vmem [shape: bf16[128,128], index: 2, kind: input, shape index: {}]
  %s3 = inlined_call_operand.vmem [shape: f32[1,128], index: 3, kind: input, shape index: {}]
  %s4 = inlined_call_operand.vmem [shape: bf16[2,128,128], index: 4, kind: input, shape index: {}]
  %s5 = inlined_call_operand.vmem [shape: f32[2,1,128], index: 5, kind: input, shape index: {}]
  %s6 = inlined_call_operand.vmem [shape: bf16[8,128], index: 6, kind: input, shape index: {}]
  %s7 = inlined_call_operand.vmem [shape: bf16[128,128], index: 7, kind: input, shape index: {}]
  %s8 = inlined_call_operand.vmem [shape: f32[1,128], index: 8, kind: input, shape index: {}]
  %s9 = inlined_call_operand.vmem [shape: f32[8,128], index: 9, kind: output, shape index: {}]
  %s10 = sld [smem:[#allocation0]]
  $region46: #{duvenaud_forward.1} parent=0
    _
  %s12 = ssub.s32 1, %s10
  %s13 = scalar_select 0, %s12, %s10
  // Predicated region
  $region2: #{duvenaud_forward.1} parent=0 // pred_check
    _
  $region3: #{duvenaud_forward.1} parent=0 // pred_check_branch
    %15 = sbr.rel (0) target = $region5
  $region4: #{duvenaud_forward.1} parent=0 // pred_region
    _
  $region5: #{duvenaud_forward.1} parent=0 // pred_fallthru
    _
  // Predicated region
  $region6: #{duvenaud_forward.1} parent=0 // pred_check
    _
  $region7: #{duvenaud_forward.1} parent=0 // pred_check_branch
    %17 = sbr.rel (0) target = $region9
  $region8: #{duvenaud_forward.1} parent=0 // pred_region
    _
  $region9: #{duvenaud_forward.1} parent=0 // pred_fallthru
    _
  // Predicated region
  $region10: #{duvenaud_forward.1} parent=0 // pred_check
    _
  $region11: #{duvenaud_forward.1} parent=0 // pred_check_branch
    %19 = sbr.rel (0) target = $region13
  $region12: #{duvenaud_forward.1} parent=0 // pred_region
    _
  $region13: #{duvenaud_forward.1} parent=0 // pred_fallthru
    _
  // Predicated region
  $region14: #{duvenaud_forward.1} parent=0 // pred_check
    _
  $region15: #{duvenaud_forward.1} parent=0 // pred_check_branch
    %21 = sbr.rel (0) target = $region17
  $region16: #{duvenaud_forward.1} parent=0 // pred_region
    _
  $region17: #{duvenaud_forward.1} parent=0 // pred_fallthru
    _
  // Predicated region
  $region18: #{duvenaud_forward.1} parent=0 // pred_check
    _
  $region19: #{duvenaud_forward.1} parent=0 // pred_check_branch
    %23 = sbr.rel (0) target = $region21
  $region20: #{duvenaud_forward.1} parent=0 // pred_region
    _
  $region21: #{duvenaud_forward.1} parent=0 // pred_fallthru
    _
  // Predicated region
  $region22: #{duvenaud_forward.1} parent=0 // pred_check
    _
  $region23: #{duvenaud_forward.1} parent=0 // pred_check_branch
    %25 = sbr.rel (0) target = $region25
  $region24: #{duvenaud_forward.1} parent=0 // pred_region
    _
  $region25: #{duvenaud_forward.1} parent=0 // pred_fallthru
    _
  // Predicated region
  $region26: #{duvenaud_forward.1} parent=0 // pred_check
    _
  $region27: #{duvenaud_forward.1} parent=0 // pred_check_branch
    %27 = sbr.rel (0) target = $region29
  $region28: #{duvenaud_forward.1} parent=0 // pred_region
    _
  $region29: #{duvenaud_forward.1} parent=0 // pred_fallthru
    _
  // Predicated region
  $region30: #{duvenaud_forward.1} parent=0 // pred_check
    _
  $region31: #{duvenaud_forward.1} parent=0 // pred_check_branch
    %29 = sbr.rel (0) target = $region33
  $region32: #{duvenaud_forward.1} parent=0 // pred_region
    _
  $region33: #{duvenaud_forward.1} parent=0 // pred_fallthru
    _
  // Predicated region
  $region34: #{duvenaud_forward.1} parent=0 // pred_check
    _
  $region35: #{duvenaud_forward.1} parent=0 // pred_check_branch
    %31 = sbr.rel (0) target = $region37
  $region36: #{duvenaud_forward.1} parent=0 // pred_region
    _
  $region37: #{duvenaud_forward.1} parent=0 // pred_fallthru
    _
  %v32 = vld [vmem:[%s0] sm:$0xf]
  %v33 = vld [vmem:[%s0 + $0x4] sm:$0xf]
  %v34 = vld [vmem:[%s0 + $0x8] sm:$0xf]
  %v35 = vld [vmem:[%s0 + $0xc] sm:$0xf]
  %v36 = vld [vmem:[%s0 + $0x10] sm:$0xf]
  %v37 = vld [vmem:[%s0 + $0x14] sm:$0xf]
  %v38 = vld [vmem:[%s0 + $0x18] sm:$0xf]
  %v39 = vld [vmem:[%s0 + $0x1c] sm:$0xf]
  %v40 = vld [vmem:[%s0 + $0x20] sm:$0xf]
  %v41 = vld [vmem:[%s0 + $0x24] sm:$0xf]
  %v42 = vld [vmem:[%s0 + $0x28] sm:$0xf]
  %v43 = vld [vmem:[%s0 + $0x2c] sm:$0xf]
  %v44 = vld [vmem:[%s0 + $0x30] sm:$0xf]
  %v45 = vld [vmem:[%s0 + $0x34] sm:$0xf]
  %v46 = vld [vmem:[%s0 + $0x38] sm:$0xf]
  %v47 = vld [vmem:[%s0 + $0x3c] sm:$0xf]
  %v48 = vld [vmem:[%s1] sm:$0xf]
  %v49 = vld [vmem:[%s1 + $0x4] sm:$0xf]
  %v50 = vld [vmem:[%s1 + $0x8] sm:$0xf]
  %v51 = vld [vmem:[%s1 + $0xc] sm:$0xf]
  %v52 = vld [vmem:[%s1 + $0x10] sm:$0xf]
  %v53 = vld [vmem:[%s1 + $0x14] sm:$0xf]
  %v54 = vld [vmem:[%s1 + $0x18] sm:$0xf]
  %v55 = vld [vmem:[%s1 + $0x1c] sm:$0xf]
  %v56 = vld [vmem:[%s1 + $0x20] sm:$0xf]
  %v57 = vld [vmem:[%s1 + $0x24] sm:$0xf]
  %v58 = vld [vmem:[%s1 + $0x28] sm:$0xf]
  %v59 = vld [vmem:[%s1 + $0x2c] sm:$0xf]
  %v60 = vld [vmem:[%s1 + $0x30] sm:$0xf]
  %v61 = vld [vmem:[%s1 + $0x34] sm:$0xf]
  %v62 = vld [vmem:[%s1 + $0x38] sm:$0xf]
  %v63 = vld [vmem:[%s1 + $0x3c] sm:$0xf]
  %v80 = vunpack.c.l.b16 %v32
  %v81 = vunpack.c.l.b16 %v33
  %v82 = vunpack.c.l.b16 %v34
  %v83 = vunpack.c.l.b16 %v35
  %v84 = vunpack.c.l.b16 %v36
  %v85 = vunpack.c.l.b16 %v37
  %v86 = vunpack.c.l.b16 %v38
  %v87 = vunpack.c.l.b16 %v39
  %v88 = vunpack.c.l.b16 %v40
  %v89 = vunpack.c.l.b16 %v41
  %v90 = vunpack.c.l.b16 %v42
  %v91 = vunpack.c.l.b16 %v43
  %v92 = vunpack.c.l.b16 %v44
  %v93 = vunpack.c.l.b16 %v45
  %v94 = vunpack.c.l.b16 %v46
  %v95 = vunpack.c.l.b16 %v47
  %v96 = vpack.c.b16 %v81, %v80
  %v97 = vpack.c.b16 %v83, %v82
  %v98 = vpack.c.b16 %v85, %v84
  %v99 = vpack.c.b16 %v87, %v86
  %v100 = vpack.c.b16 %v89, %v88
  %v101 = vpack.c.b16 %v91, %v90
  %v102 = vpack.c.b16 %v93, %v92
  %v103 = vpack.c.b16 %v95, %v94
  %v128 = vunpack.c.l.b16 %v48
  %v129 = vunpack.c.l.b16 %v49
  %v130 = vunpack.c.l.b16 %v50
  %v131 = vunpack.c.l.b16 %v51
  %v132 = vunpack.c.l.b16 %v52
  %v133 = vunpack.c.l.b16 %v53
  %v134 = vunpack.c.l.b16 %v54
  %v135 = vunpack.c.l.b16 %v55
  %v136 = vunpack.c.l.b16 %v56
  %v137 = vunpack.c.l.b16 %v57
  %v138 = vunpack.c.l.b16 %v58
  %v139 = vunpack.c.l.b16 %v59
  %v140 = vunpack.c.l.b16 %v60
  %v141 = vunpack.c.l.b16 %v61
  %v142 = vunpack.c.l.b16 %v62
  %v143 = vunpack.c.l.b16 %v63
  %v144 = vpack.c.b16 %v129, %v128
  %v145 = vpack.c.b16 %v131, %v130
  %v146 = vpack.c.b16 %v133, %v132
  %v147 = vpack.c.b16 %v135, %v134
  %v148 = vpack.c.b16 %v137, %v136
  %v149 = vpack.c.b16 %v139, %v138
  %v150 = vpack.c.b16 %v141, %v140
  %v151 = vpack.c.b16 %v143, %v142
  %160 = vmatpush.bf16.msra.mxu0 %v151
  %161 = vmatpush.bf16.msra.mxu0 %v150
  %162 = vmatpush.bf16.msra.mxu0 %v149
  %163 = vmatpush.bf16.msra.mxu0 %v148
  %164 = vmatpush.bf16.msra.mxu0 %v147
  %165 = vmatpush.bf16.msra.mxu0 %v146
  %166 = vmatpush.bf16.msra.mxu0 %v145
  %167 = vmatpush.bf16.msra.mxu0 %v144
  %168 = vmatmul.bf16.gmra.mxu0 %v96
  %v169 = vpop.f32.mrf.mxu0
  %v170 = vadd.f32 0.0, %v169
  %v171 = vpop.f32.mrf.mxu0
  %v172 = vadd.f32 0.0, %v171
  %173 = vmatmul.bf16.gmra.mxu0 %v97
  %v174 = vpop.f32.mrf.mxu0
  %v175 = vadd.f32 0.0, %v174
  %v176 = vpop.f32.mrf.mxu0
  %v177 = vadd.f32 0.0, %v176
  %178 = vmatmul.bf16.gmra.mxu0 %v98
  %v179 = vpop.f32.mrf.mxu0
  %v180 = vadd.f32 0.0, %v179
  %v181 = vpop.f32.mrf.mxu0
  %v182 = vadd.f32 0.0, %v181
  %183 = vmatmul.bf16.gmra.mxu0 %v99
  %v184 = vpop.f32.mrf.mxu0
  %v185 = vadd.f32 0.0, %v184
  %v186 = vpop.f32.mrf.mxu0
  %v187 = vadd.f32 0.0, %v186
  %188 = vmatmul.bf16.gmra.mxu0 %v100
  %v189 = vpop.f32.mrf.mxu0
  %v190 = vadd.f32 0.0, %v189
  %v191 = vpop.f32.mrf.mxu0
  %v192 = vadd.f32 0.0, %v191
  %193 = vmatmul.bf16.gmra.mxu0 %v101
  %v194 = vpop.f32.mrf.mxu0
  %v195 = vadd.f32 0.0, %v194
  %v196 = vpop.f32.mrf.mxu0
  %v197 = vadd.f32 0.0, %v196
  %198 = vmatmul.bf16.gmra.mxu0 %v102
  %v199 = vpop.f32.mrf.mxu0
  %v200 = vadd.f32 0.0, %v199
  %v201 = vpop.f32.mrf.mxu0
  %v202 = vadd.f32 0.0, %v201
  %203 = vmatmul.bf16.gmra.mxu0 %v103
  %v204 = vpop.f32.mrf.mxu0
  %v205 = vadd.f32 0.0, %v204
  %v206 = vpop.f32.mrf.mxu0
  %v207 = vadd.f32 0.0, %v206
  %208 = vdwg.mxu0
  %v209 = vld [vmem:[%s2] sm:$0xf]
  %v210 = vld [vmem:[%s2 + $0x4] sm:$0xf]
  %v211 = vld [vmem:[%s2 + $0x8] sm:$0xf]
  %v212 = vld [vmem:[%s2 + $0xc] sm:$0xf]
  %v213 = vld [vmem:[%s2 + $0x10] sm:$0xf]
  %v214 = vld [vmem:[%s2 + $0x14] sm:$0xf]
  %v215 = vld [vmem:[%s2 + $0x18] sm:$0xf]
  %v216 = vld [vmem:[%s2 + $0x1c] sm:$0xf]
  %v217 = vld [vmem:[%s2 + $0x20] sm:$0xf]
  %v218 = vld [vmem:[%s2 + $0x24] sm:$0xf]
  %v219 = vld [vmem:[%s2 + $0x28] sm:$0xf]
  %v220 = vld [vmem:[%s2 + $0x2c] sm:$0xf]
  %v221 = vld [vmem:[%s2 + $0x30] sm:$0xf]
  %v222 = vld [vmem:[%s2 + $0x34] sm:$0xf]
  %v223 = vld [vmem:[%s2 + $0x38] sm:$0xf]
  %v224 = vld [vmem:[%s2 + $0x3c] sm:$0xf]
  %v225 = vld [vmem:[%s3] sm:$0x1]
  %v227 = vperm.slane %v225, 0
  %v245 = vunpack.c.l.b16 %v209
  %v246 = vunpack.c.l.b16 %v210
  %v247 = vunpack.c.l.b16 %v211
  %v248 = vunpack.c.l.b16 %v212
  %v249 = vunpack.c.l.b16 %v213
  %v250 = vunpack.c.l.b16 %v214
  %v251 = vunpack.c.l.b16 %v215
  %v252 = vunpack.c.l.b16 %v216
  %v253 = vunpack.c.l.b16 %v217
  %v254 = vunpack.c.l.b16 %v218
  %v255 = vunpack.c.l.b16 %v219
  %v256 = vunpack.c.l.b16 %v220
  %v257 = vunpack.c.l.b16 %v221
  %v258 = vunpack.c.l.b16 %v222
  %v259 = vunpack.c.l.b16 %v223
  %v260 = vunpack.c.l.b16 %v224
  %v261 = vpack.c.b16 %v246, %v245
  %v262 = vpack.c.b16 %v248, %v247
  %v263 = vpack.c.b16 %v250, %v249
  %v264 = vpack.c.b16 %v252, %v251
  %v265 = vpack.c.b16 %v254, %v253
  %v266 = vpack.c.b16 %v256, %v255
  %v267 = vpack.c.b16 %v258, %v257
  %v268 = vpack.c.b16 %v260, %v259
  %277 = vmatpush.bf16.msra.mxu0 %v268
  %278 = vmatpush.bf16.msra.mxu0 %v267
  %279 = vmatpush.bf16.msra.mxu0 %v266
  %280 = vmatpush.bf16.msra.mxu0 %v265
  %281 = vmatpush.bf16.msra.mxu0 %v264
  %282 = vmatpush.bf16.msra.mxu0 %v263
  %283 = vmatpush.bf16.msra.mxu0 %v262
  %284 = vmatpush.bf16.msra.mxu0 %v261
  %285 = vmatmul.f32.gmra.mxu0 %v170
  %v286 = vpop.f32.mrf.mxu0
  %v287 = vadd.f32 %v227, %v286
  %288 = vmatmul.f32.gmra.mxu0 %v172
  %v289 = vpop.f32.mrf.mxu0
  %v290 = vadd.f32 %v227, %v289
  %291 = vmatmul.f32.gmra.mxu0 %v175
  %v292 = vpop.f32.mrf.mxu0
  %v293 = vadd.f32 %v227, %v292
  %294 = vmatmul.f32.gmra.mxu0 %v177
  %v295 = vpop.f32.mrf.mxu0
  %v296 = vadd.f32 %v227, %v295
  %297 = vmatmul.f32.gmra.mxu0 %v180
  %v298 = vpop.f32.mrf.mxu0
  %v299 = vadd.f32 %v227, %v298
  %300 = vmatmul.f32.gmra.mxu0 %v182
  %v301 = vpop.f32.mrf.mxu0
  %v302 = vadd.f32 %v227, %v301
  %303 = vmatmul.f32.gmra.mxu0 %v185
  %v304 = vpop.f32.mrf.mxu0
  %v305 = vadd.f32 %v227, %v304
  %306 = vmatmul.f32.gmra.mxu0 %v187
  %v307 = vpop.f32.mrf.mxu0
  %v308 = vadd.f32 %v227, %v307
  %309 = vmatmul.f32.gmra.mxu0 %v190
  %v310 = vpop.f32.mrf.mxu0
  %v311 = vadd.f32 %v227, %v310
  %312 = vmatmul.f32.gmra.mxu0 %v192
  %v313 = vpop.f32.mrf.mxu0
  %v314 = vadd.f32 %v227, %v313
  %315 = vmatmul.f32.gmra.mxu0 %v195
  %v316 = vpop.f32.mrf.mxu0
  %v317 = vadd.f32 %v227, %v316
  %318 = vmatmul.f32.gmra.mxu0 %v197
  %v319 = vpop.f32.mrf.mxu0
  %v320 = vadd.f32 %v227, %v319
  %321 = vmatmul.f32.gmra.mxu0 %v200
  %v322 = vpop.f32.mrf.mxu0
  %v323 = vadd.f32 %v227, %v322
  %324 = vmatmul.f32.gmra.mxu0 %v202
  %v325 = vpop.f32.mrf.mxu0
  %v326 = vadd.f32 %v227, %v325
  %327 = vmatmul.f32.gmra.mxu0 %v205
  %v328 = vpop.f32.mrf.mxu0
  %v329 = vadd.f32 %v227, %v328
  %330 = vmatmul.f32.gmra.mxu0 %v207
  %v331 = vpop.f32.mrf.mxu0
  %v332 = vadd.f32 %v227, %v331
  %333 = vdwg.mxu0
  %v334 = vmax.f32 %v287, 0.0
  %v335 = vmax.f32 %v290, 0.0
  %v336 = vmax.f32 %v293, 0.0
  %v337 = vmax.f32 %v296, 0.0
  %v338 = vmax.f32 %v299, 0.0
  %v339 = vmax.f32 %v302, 0.0
  %v340 = vmax.f32 %v305, 0.0
  %v341 = vmax.f32 %v308, 0.0
  %v342 = vmax.f32 %v311, 0.0
  %v343 = vmax.f32 %v314, 0.0
  %v344 = vmax.f32 %v317, 0.0
  %v345 = vmax.f32 %v320, 0.0
  %v346 = vmax.f32 %v323, 0.0
  %v347 = vmax.f32 %v326, 0.0
  %v348 = vmax.f32 %v329, 0.0
  %v349 = vmax.f32 %v332, 0.0
  %v350 = vpack.c.bf16 %v335, %v334
  %v351 = vpack.c.bf16 %v337, %v336
  %v352 = vpack.c.bf16 %v339, %v338
  %v353 = vpack.c.bf16 %v341, %v340
  %v354 = vpack.c.bf16 %v343, %v342
  %v355 = vpack.c.bf16 %v345, %v344
  %v356 = vpack.c.bf16 %v347, %v346
  %v357 = vpack.c.bf16 %v349, %v348
  %358 = vmatpush.bf16.msra.mxu0 %v357
  %359 = vmatpush.bf16.msra.mxu0 %v356
  %360 = vmatpush.bf16.msra.mxu0 %v355
  %361 = vmatpush.bf16.msra.mxu0 %v354
  %362 = vmatpush.bf16.msra.mxu0 %v353
  %363 = vmatpush.bf16.msra.mxu0 %v352
  %364 = vmatpush.bf16.msra.mxu0 %v351
  %365 = vmatpush.bf16.msra.mxu0 %v350
  %366 = vmatmul.bf16.gmra.mxu0 %v96
  %v367 = vpop.f32.mrf.mxu0
  %v368 = vadd.f32 0.0, %v367
  %v369 = vpop.f32.mrf.mxu0
  %v370 = vadd.f32 0.0, %v369
  %371 = vmatmul.bf16.gmra.mxu0 %v97
  %v372 = vpop.f32.mrf.mxu0
  %v373 = vadd.f32 0.0, %v372
  %v374 = vpop.f32.mrf.mxu0
  %v375 = vadd.f32 0.0, %v374
  %376 = vmatmul.bf16.gmra.mxu0 %v98
  %v377 = vpop.f32.mrf.mxu0
  %v378 = vadd.f32 0.0, %v377
  %v379 = vpop.f32.mrf.mxu0
  %v380 = vadd.f32 0.0, %v379
  %381 = vmatmul.bf16.gmra.mxu0 %v99
  %v382 = vpop.f32.mrf.mxu0
  %v383 = vadd.f32 0.0, %v382
  %v384 = vpop.f32.mrf.mxu0
  %v385 = vadd.f32 0.0, %v384
  %386 = vmatmul.bf16.gmra.mxu0 %v100
  %v387 = vpop.f32.mrf.mxu0
  %v388 = vadd.f32 0.0, %v387
  %v389 = vpop.f32.mrf.mxu0
  %v390 = vadd.f32 0.0, %v389
  %391 = vmatmul.bf16.gmra.mxu0 %v101
  %v392 = vpop.f32.mrf.mxu0
  %v393 = vadd.f32 0.0, %v392
  %v394 = vpop.f32.mrf.mxu0
  %v395 = vadd.f32 0.0, %v394
  %396 = vmatmul.bf16.gmra.mxu0 %v102
  %v397 = vpop.f32.mrf.mxu0
  %v398 = vadd.f32 0.0, %v397
  %v399 = vpop.f32.mrf.mxu0
  %v400 = vadd.f32 0.0, %v399
  %401 = vmatmul.bf16.gmra.mxu0 %v103
  %v402 = vpop.f32.mrf.mxu0
  %v403 = vadd.f32 0.0, %v402
  %v404 = vpop.f32.mrf.mxu0
  %v405 = vadd.f32 0.0, %v404
  %406 = vdwg.mxu0
  %v407 = vld [vmem:[%s4] sm:$0xf]
  %v408 = vld [vmem:[%s4 + $0x4] sm:$0xf]
  %v409 = vld [vmem:[%s4 + $0x8] sm:$0xf]
  %v410 = vld [vmem:[%s4 + $0xc] sm:$0xf]
  %v411 = vld [vmem:[%s4 + $0x10] sm:$0xf]
  %v412 = vld [vmem:[%s4 + $0x14] sm:$0xf]
  %v413 = vld [vmem:[%s4 + $0x18] sm:$0xf]
  %v414 = vld [vmem:[%s4 + $0x1c] sm:$0xf]
  %v415 = vld [vmem:[%s4 + $0x20] sm:$0xf]
  %v416 = vld [vmem:[%s4 + $0x24] sm:$0xf]
  %v417 = vld [vmem:[%s4 + $0x28] sm:$0xf]
  %v418 = vld [vmem:[%s4 + $0x2c] sm:$0xf]
  %v419 = vld [vmem:[%s4 + $0x30] sm:$0xf]
  %v420 = vld [vmem:[%s4 + $0x34] sm:$0xf]
  %v421 = vld [vmem:[%s4 + $0x38] sm:$0xf]
  %v422 = vld [vmem:[%s4 + $0x3c] sm:$0xf]
  %v423 = vld [vmem:[%s5] sm:$0x1]
  %v425 = vperm.slane %v423, 0
  %v443 = vunpack.c.l.b16 %v407
  %v444 = vunpack.c.l.b16 %v408
  %v445 = vunpack.c.l.b16 %v409
  %v446 = vunpack.c.l.b16 %v410
  %v447 = vunpack.c.l.b16 %v411
  %v448 = vunpack.c.l.b16 %v412
  %v449 = vunpack.c.l.b16 %v413
  %v450 = vunpack.c.l.b16 %v414
  %v451 = vunpack.c.l.b16 %v415
  %v452 = vunpack.c.l.b16 %v416
  %v453 = vunpack.c.l.b16 %v417
  %v454 = vunpack.c.l.b16 %v418
  %v455 = vunpack.c.l.b16 %v419
  %v456 = vunpack.c.l.b16 %v420
  %v457 = vunpack.c.l.b16 %v421
  %v458 = vunpack.c.l.b16 %v422
  %v459 = vpack.c.b16 %v444, %v443
  %v460 = vpack.c.b16 %v446, %v445
  %v461 = vpack.c.b16 %v448, %v447
  %v462 = vpack.c.b16 %v450, %v449
  %v463 = vpack.c.b16 %v452, %v451
  %v464 = vpack.c.b16 %v454, %v453
  %v465 = vpack.c.b16 %v456, %v455
  %v466 = vpack.c.b16 %v458, %v457
  %475 = vmatpush.bf16.msra.mxu0 %v466
  %476 = vmatpush.bf16.msra.mxu0 %v465
  %477 = vmatpush.bf16.msra.mxu0 %v464
  %478 = vmatpush.bf16.msra.mxu0 %v463
  %479 = vmatpush.bf16.msra.mxu0 %v462
  %480 = vmatpush.bf16.msra.mxu0 %v461
  %481 = vmatpush.bf16.msra.mxu0 %v460
  %482 = vmatpush.bf16.msra.mxu0 %v459
  %483 = vmatmul.f32.gmra.mxu0 %v368
  %v484 = vpop.f32.mrf.mxu0
  %v485 = vadd.f32 %v425, %v484
  %486 = vmatmul.f32.gmra.mxu0 %v370
  %v487 = vpop.f32.mrf.mxu0
  %v488 = vadd.f32 %v425, %v487
  %489 = vmatmul.f32.gmra.mxu0 %v373
  %v490 = vpop.f32.mrf.mxu0
  %v491 = vadd.f32 %v425, %v490
  %492 = vmatmul.f32.gmra.mxu0 %v375
  %v493 = vpop.f32.mrf.mxu0
  %v494 = vadd.f32 %v425, %v493
  %495 = vmatmul.f32.gmra.mxu0 %v378
  %v496 = vpop.f32.mrf.mxu0
  %v497 = vadd.f32 %v425, %v496
  %498 = vmatmul.f32.gmra.mxu0 %v380
  %v499 = vpop.f32.mrf.mxu0
  %v500 = vadd.f32 %v425, %v499
  %501 = vmatmul.f32.gmra.mxu0 %v383
  %v502 = vpop.f32.mrf.mxu0
  %v503 = vadd.f32 %v425, %v502
  %504 = vmatmul.f32.gmra.mxu0 %v385
  %v505 = vpop.f32.mrf.mxu0
  %v506 = vadd.f32 %v425, %v505
  %507 = vmatmul.f32.gmra.mxu0 %v388
  %v508 = vpop.f32.mrf.mxu0
  %v509 = vadd.f32 %v425, %v508
  %510 = vmatmul.f32.gmra.mxu0 %v390
  %v511 = vpop.f32.mrf.mxu0
  %v512 = vadd.f32 %v425, %v511
  %513 = vmatmul.f32.gmra.mxu0 %v393
  %v514 = vpop.f32.mrf.mxu0
  %v515 = vadd.f32 %v425, %v514
  %516 = vmatmul.f32.gmra.mxu0 %v395
  %v517 = vpop.f32.mrf.mxu0
  %v518 = vadd.f32 %v425, %v517
  %519 = vmatmul.f32.gmra.mxu0 %v398
  %v520 = vpop.f32.mrf.mxu0
  %v521 = vadd.f32 %v425, %v520
  %522 = vmatmul.f32.gmra.mxu0 %v400
  %v523 = vpop.f32.mrf.mxu0
  %v524 = vadd.f32 %v425, %v523
  %525 = vmatmul.f32.gmra.mxu0 %v403
  %v526 = vpop.f32.mrf.mxu0
  %v527 = vadd.f32 %v425, %v526
  %528 = vmatmul.f32.gmra.mxu0 %v405
  %v529 = vpop.f32.mrf.mxu0
  %v530 = vadd.f32 %v425, %v529
  %531 = vdwg.mxu0
  %v532 = vmax.f32 %v485, 0.0
  %v533 = vmax.f32 %v488, 0.0
  %v534 = vmax.f32 %v491, 0.0
  %v535 = vmax.f32 %v494, 0.0
  %v536 = vmax.f32 %v497, 0.0
  %v537 = vmax.f32 %v500, 0.0
  %v538 = vmax.f32 %v503, 0.0
  %v539 = vmax.f32 %v506, 0.0
  %v540 = vmax.f32 %v509, 0.0
  %v541 = vmax.f32 %v512, 0.0
  %v542 = vmax.f32 %v515, 0.0
  %v543 = vmax.f32 %v518, 0.0
  %v544 = vmax.f32 %v521, 0.0
  %v545 = vmax.f32 %v524, 0.0
  %v546 = vmax.f32 %v527, 0.0
  %v547 = vmax.f32 %v530, 0.0
  %v548 = vpack.c.bf16 %v533, %v532
  %v549 = vpack.c.bf16 %v535, %v534
  %v550 = vpack.c.bf16 %v537, %v536
  %v551 = vpack.c.bf16 %v539, %v538
  %v552 = vpack.c.bf16 %v541, %v540
  %v553 = vpack.c.bf16 %v543, %v542
  %v554 = vpack.c.bf16 %v545, %v544
  %v555 = vpack.c.bf16 %v547, %v546
  %556 = vmatpush.bf16.msra.mxu0 %v555
  %557 = vmatpush.bf16.msra.mxu0 %v554
  %558 = vmatpush.bf16.msra.mxu0 %v553
  %559 = vmatpush.bf16.msra.mxu0 %v552
  %560 = vmatpush.bf16.msra.mxu0 %v551
  %561 = vmatpush.bf16.msra.mxu0 %v550
  %562 = vmatpush.bf16.msra.mxu0 %v549
  %563 = vmatpush.bf16.msra.mxu0 %v548
  %564 = vmatmul.bf16.gmra.mxu0 %v96
  %v565 = vpop.f32.mrf.mxu0
  %v566 = vadd.f32 0.0, %v565
  %v567 = vpop.f32.mrf.mxu0
  %v568 = vadd.f32 0.0, %v567
  %569 = vmatmul.bf16.gmra.mxu0 %v97
  %v570 = vpop.f32.mrf.mxu0
  %v571 = vadd.f32 0.0, %v570
  %v572 = vpop.f32.mrf.mxu0
  %v573 = vadd.f32 0.0, %v572
  %574 = vmatmul.bf16.gmra.mxu0 %v98
  %v575 = vpop.f32.mrf.mxu0
  %v576 = vadd.f32 0.0, %v575
  %v577 = vpop.f32.mrf.mxu0
  %v578 = vadd.f32 0.0, %v577
  %579 = vmatmul.bf16.gmra.mxu0 %v99
  %v580 = vpop.f32.mrf.mxu0
  %v581 = vadd.f32 0.0, %v580
  %v582 = vpop.f32.mrf.mxu0
  %v583 = vadd.f32 0.0, %v582
  %584 = vmatmul.bf16.gmra.mxu0 %v100
  %v585 = vpop.f32.mrf.mxu0
  %v586 = vadd.f32 0.0, %v585
  %v587 = vpop.f32.mrf.mxu0
  %v588 = vadd.f32 0.0, %v587
  %589 = vmatmul.bf16.gmra.mxu0 %v101
  %v590 = vpop.f32.mrf.mxu0
  %v591 = vadd.f32 0.0, %v590
  %v592 = vpop.f32.mrf.mxu0
  %v593 = vadd.f32 0.0, %v592
  %594 = vmatmul.bf16.gmra.mxu0 %v102
  %v595 = vpop.f32.mrf.mxu0
  %v596 = vadd.f32 0.0, %v595
  %v597 = vpop.f32.mrf.mxu0
  %v598 = vadd.f32 0.0, %v597
  %599 = vmatmul.bf16.gmra.mxu0 %v103
  %v600 = vpop.f32.mrf.mxu0
  %v601 = vadd.f32 0.0, %v600
  %v602 = vpop.f32.mrf.mxu0
  %v603 = vadd.f32 0.0, %v602
  %604 = vdwg.mxu0
  %s605 = scalar_lea.vmem %s4, 64
  %v606 = vld [vmem:[%s605] sm:$0xf]
  %v607 = vld [vmem:[%s605 + $0x4] sm:$0xf]
  %v608 = vld [vmem:[%s605 + $0x8] sm:$0xf]
  %v609 = vld [vmem:[%s605 + $0xc] sm:$0xf]
  %v610 = vld [vmem:[%s605 + $0x10] sm:$0xf]
  %v611 = vld [vmem:[%s605 + $0x14] sm:$0xf]
  %v612 = vld [vmem:[%s605 + $0x18] sm:$0xf]
  %v613 = vld [vmem:[%s605 + $0x1c] sm:$0xf]
  %v614 = vld [vmem:[%s605 + $0x20] sm:$0xf]
  %v615 = vld [vmem:[%s605 + $0x24] sm:$0xf]
  %v616 = vld [vmem:[%s605 + $0x28] sm:$0xf]
  %v617 = vld [vmem:[%s605 + $0x2c] sm:$0xf]
  %v618 = vld [vmem:[%s605 + $0x30] sm:$0xf]
  %v619 = vld [vmem:[%s605 + $0x34] sm:$0xf]
  %v620 = vld [vmem:[%s605 + $0x38] sm:$0xf]
  %v621 = vld [vmem:[%s605 + $0x3c] sm:$0xf]
  %s622 = scalar_lea.vmem %s5, 1
  %v623 = vld [vmem:[%s622] sm:$0x1]
  %v625 = vperm.slane %v623, 0
  %v643 = vunpack.c.l.b16 %v606
  %v644 = vunpack.c.l.b16 %v607
  %v645 = vunpack.c.l.b16 %v608
  %v646 = vunpack.c.l.b16 %v609
  %v647 = vunpack.c.l.b16 %v610
  %v648 = vunpack.c.l.b16 %v611
  %v649 = vunpack.c.l.b16 %v612
  %v650 = vunpack.c.l.b16 %v613
  %v651 = vunpack.c.l.b16 %v614
  %v652 = vunpack.c.l.b16 %v615
  %v653 = vunpack.c.l.b16 %v616
  %v654 = vunpack.c.l.b16 %v617
  %v655 = vunpack.c.l.b16 %v618
  %v656 = vunpack.c.l.b16 %v619
  %v657 = vunpack.c.l.b16 %v620
  %v658 = vunpack.c.l.b16 %v621
  %v659 = vpack.c.b16 %v644, %v643
  %v660 = vpack.c.b16 %v646, %v645
  %v661 = vpack.c.b16 %v648, %v647
  %v662 = vpack.c.b16 %v650, %v649
  %v663 = vpack.c.b16 %v652, %v651
  %v664 = vpack.c.b16 %v654, %v653
  %v665 = vpack.c.b16 %v656, %v655
  %v666 = vpack.c.b16 %v658, %v657
  %675 = vmatpush.bf16.msra.mxu0 %v666
  %676 = vmatpush.bf16.msra.mxu0 %v665
  %677 = vmatpush.bf16.msra.mxu0 %v664
  %678 = vmatpush.bf16.msra.mxu0 %v663
  %679 = vmatpush.bf16.msra.mxu0 %v662
  %680 = vmatpush.bf16.msra.mxu0 %v661
  %681 = vmatpush.bf16.msra.mxu0 %v660
  %682 = vmatpush.bf16.msra.mxu0 %v659
  %683 = vmatmul.f32.gmra.mxu0 %v566
  %v684 = vpop.f32.mrf.mxu0
  %v685 = vadd.f32 %v625, %v684
  %686 = vmatmul.f32.gmra.mxu0 %v568
  %v687 = vpop.f32.mrf.mxu0
  %v688 = vadd.f32 %v625, %v687
  %689 = vmatmul.f32.gmra.mxu0 %v571
  %v690 = vpop.f32.mrf.mxu0
  %v691 = vadd.f32 %v625, %v690
  %692 = vmatmul.f32.gmra.mxu0 %v573
  %v693 = vpop.f32.mrf.mxu0
  %v694 = vadd.f32 %v625, %v693
  %695 = vmatmul.f32.gmra.mxu0 %v576
  %v696 = vpop.f32.mrf.mxu0
  %v697 = vadd.f32 %v625, %v696
  %698 = vmatmul.f32.gmra.mxu0 %v578
  %v699 = vpop.f32.mrf.mxu0
  %v700 = vadd.f32 %v625, %v699
  %701 = vmatmul.f32.gmra.mxu0 %v581
  %v702 = vpop.f32.mrf.mxu0
  %v703 = vadd.f32 %v625, %v702
  %704 = vmatmul.f32.gmra.mxu0 %v583
  %v705 = vpop.f32.mrf.mxu0
  %v706 = vadd.f32 %v625, %v705
  %707 = vmatmul.f32.gmra.mxu0 %v586
  %v708 = vpop.f32.mrf.mxu0
  %v709 = vadd.f32 %v625, %v708
  %710 = vmatmul.f32.gmra.mxu0 %v588
  %v711 = vpop.f32.mrf.mxu0
  %v712 = vadd.f32 %v625, %v711
  %713 = vmatmul.f32.gmra.mxu0 %v591
  %v714 = vpop.f32.mrf.mxu0
  %v715 = vadd.f32 %v625, %v714
  %716 = vmatmul.f32.gmra.mxu0 %v593
  %v717 = vpop.f32.mrf.mxu0
  %v718 = vadd.f32 %v625, %v717
  %719 = vmatmul.f32.gmra.mxu0 %v596
  %v720 = vpop.f32.mrf.mxu0
  %v721 = vadd.f32 %v625, %v720
  %722 = vmatmul.f32.gmra.mxu0 %v598
  %v723 = vpop.f32.mrf.mxu0
  %v724 = vadd.f32 %v625, %v723
  %725 = vmatmul.f32.gmra.mxu0 %v601
  %v726 = vpop.f32.mrf.mxu0
  %v727 = vadd.f32 %v625, %v726
  %728 = vmatmul.f32.gmra.mxu0 %v603
  %v729 = vpop.f32.mrf.mxu0
  %v730 = vadd.f32 %v625, %v729
  %731 = vdwg.mxu0
  %v732 = vmax.f32 %v685, 0.0
  %v733 = vmax.f32 %v688, 0.0
  %v734 = vmax.f32 %v691, 0.0
  %v735 = vmax.f32 %v694, 0.0
  %v736 = vmax.f32 %v697, 0.0
  %v737 = vmax.f32 %v700, 0.0
  %v738 = vmax.f32 %v703, 0.0
  %v739 = vmax.f32 %v706, 0.0
  %v740 = vmax.f32 %v709, 0.0
  %v741 = vmax.f32 %v712, 0.0
  %v742 = vmax.f32 %v715, 0.0
  %v743 = vmax.f32 %v718, 0.0
  %v744 = vmax.f32 %v721, 0.0
  %v745 = vmax.f32 %v724, 0.0
  %v746 = vmax.f32 %v727, 0.0
  %v747 = vmax.f32 %v730, 0.0
  %v748 = vld [vmem:[%s6] sm:$0xf]
  %v749 = vpack.c.bf16 %v733, %v732
  %v750 = vpack.c.bf16 %v735, %v734
  %v751 = vpack.c.bf16 %v737, %v736
  %v752 = vpack.c.bf16 %v739, %v738
  %v753 = vpack.c.bf16 %v741, %v740
  %v754 = vpack.c.bf16 %v743, %v742
  %v755 = vpack.c.bf16 %v745, %v744
  %v756 = vpack.c.bf16 %v747, %v746
  %757 = vmatpush.bf16.msra.mxu0 %v756
  %758 = vmatpush.bf16.msra.mxu0 %v755
  %759 = vmatpush.bf16.msra.mxu0 %v754
  %760 = vmatpush.bf16.msra.mxu0 %v753
  %761 = vmatpush.bf16.msra.mxu0 %v752
  %762 = vmatpush.bf16.msra.mxu0 %v751
  %763 = vmatpush.bf16.msra.mxu0 %v750
  %764 = vmatpush.bf16.msra.mxu0 %v749
  %765 = vmatmul.bf16.gmra.mxu0 %v748
  %v766 = vpop.f32.mrf.mxu0
  %v767 = vadd.f32 0.0, %v766
  %v768 = vpop.f32.mrf.mxu0
  %769 = vdwg.mxu0
  %v770 = vld [vmem:[%s7] sm:$0xf]
  %v771 = vld [vmem:[%s7 + $0x4] sm:$0xf]
  %v772 = vld [vmem:[%s7 + $0x8] sm:$0xf]
  %v773 = vld [vmem:[%s7 + $0xc] sm:$0xf]
  %v774 = vld [vmem:[%s7 + $0x10] sm:$0xf]
  %v775 = vld [vmem:[%s7 + $0x14] sm:$0xf]
  %v776 = vld [vmem:[%s7 + $0x18] sm:$0xf]
  %v777 = vld [vmem:[%s7 + $0x1c] sm:$0xf]
  %v778 = vld [vmem:[%s7 + $0x20] sm:$0xf]
  %v779 = vld [vmem:[%s7 + $0x24] sm:$0xf]
  %v780 = vld [vmem:[%s7 + $0x28] sm:$0xf]
  %v781 = vld [vmem:[%s7 + $0x2c] sm:$0xf]
  %v782 = vld [vmem:[%s7 + $0x30] sm:$0xf]
  %v783 = vld [vmem:[%s7 + $0x34] sm:$0xf]
  %v784 = vld [vmem:[%s7 + $0x38] sm:$0xf]
  %v785 = vld [vmem:[%s7 + $0x3c] sm:$0xf]
  %v786 = vld [vmem:[%s8] sm:$0x1]
  %v788 = vperm.slane %v786, 0
  %v806 = vunpack.c.l.b16 %v770
  %v807 = vunpack.c.l.b16 %v771
  %v808 = vunpack.c.l.b16 %v772
  %v809 = vunpack.c.l.b16 %v773
  %v810 = vunpack.c.l.b16 %v774
  %v811 = vunpack.c.l.b16 %v775
  %v812 = vunpack.c.l.b16 %v776
  %v813 = vunpack.c.l.b16 %v777
  %v814 = vunpack.c.l.b16 %v778
  %v815 = vunpack.c.l.b16 %v779
  %v816 = vunpack.c.l.b16 %v780
  %v817 = vunpack.c.l.b16 %v781
  %v818 = vunpack.c.l.b16 %v782
  %v819 = vunpack.c.l.b16 %v783
  %v820 = vunpack.c.l.b16 %v784
  %v821 = vunpack.c.l.b16 %v785
  %v822 = vpack.c.b16 %v807, %v806
  %v823 = vpack.c.b16 %v809, %v808
  %v824 = vpack.c.b16 %v811, %v810
  %v825 = vpack.c.b16 %v813, %v812
  %v826 = vpack.c.b16 %v815, %v814
  %v827 = vpack.c.b16 %v817, %v816
  %v828 = vpack.c.b16 %v819, %v818
  %v829 = vpack.c.b16 %v821, %v820
  %838 = vmatpush.bf16.msra.mxu0 %v829
  %839 = vmatpush.bf16.msra.mxu0 %v828
  %840 = vmatpush.bf16.msra.mxu0 %v827
  %841 = vmatpush.bf16.msra.mxu0 %v826
  %842 = vmatpush.bf16.msra.mxu0 %v825
  %843 = vmatpush.bf16.msra.mxu0 %v824
  %844 = vmatpush.bf16.msra.mxu0 %v823
  %845 = vmatpush.bf16.msra.mxu0 %v822
  %846 = vmatmul.f32.gmra.mxu0 %v767
  %v847 = vpop.f32.mrf.mxu0
  %v848 = vadd.f32 %v788, %v847
  %849 = vdwg.mxu0
  %850 = vmax.xlane.f32.xlu0 %v848
  %v851 = vpop.xlane.xlu0 %850
  %v852 = vsub.f32 %v848, %v851
  %v853 = vmul.f32 %v852, 1.442695
  %v854 = vpow.pop %v853
  %855 = vadd.xlane.f32.xlu0 %v854
  %v856 = vpop.xlane.xlu0 %855
  %v857 = vrcp.pop %v856
  %v858 = vmul.f32 %v854, %v857
  %859 = vst [vmem:[%s9] sm:$0xff] %v858
  // Predicated region
  $region38: #{duvenaud_forward.1} parent=0 // pred_check
    _
  $region39: #{duvenaud_forward.1} parent=0 // pred_check_branch
    %861 = sbr.rel (0) target = $region41
  $region40: #{duvenaud_forward.1} parent=0 // pred_region
    _
  $region41: #{duvenaud_forward.1} parent=0 // pred_fallthru
    _
  // Predicated region
  $region42: #{duvenaud_forward.1} parent=0 // pred_check
    _
  $region43: #{duvenaud_forward.1} parent=0 // pred_check_branch
    %863 = sbr.rel (0) target = $region45
  $region44: #{duvenaud_forward.1} parent=0 // pred_region
    _
  $region45: #{duvenaud_forward.1} parent=0 // pred_fallthru
    _

</llo_original>
